<compile_context>
chip_gen: v6e
topology: v6e:2x2x1
jax: 0.10.0
libtpu: 0.0.40
codegen_flags: <defaults>
</compile_context>

<pallas_src>
import numpy as np
import jax
import jax.numpy as jnp
from jax.experimental import pallas as pl
from jax.experimental.pallas import tpu as pltpu


# ----------------------------------------------------------------------------
# Kernel bodies
# ----------------------------------------------------------------------------
def _channel_mix_kernel(x_ref, w_ref, b_ref, o_ref):
    """Stage 1: head.conv_1 + folded eval-BN, o = W1' @ x + b1' on a
    (channels, columns) tile of the small 1/16-res map (1x1 conv)."""
    y = jnp.dot(w_ref[...], x_ref[...], preferred_element_type=jnp.float32)
    o_ref[...] = (y + b_ref[...]).astype(o_ref.dtype)


def _upsample_relu_cls_kernel(z_ref, ah_ref, aw_ref, w2b_ref, b2b_ref, o_ref):
    """Fused stages 2-4: bilinear h-interp -> w-interp -> ReLU -> head.cls.

    z_ref   : (C, h, w)      small per-batch affine(feat) slab, bf16
    ah_ref  : (tH, h)        rows of A_h for this output-H tile, f32
    aw_ref  : (w, W)         A_w^T, f32
    w2b_ref : (K*tH, C*tH)   kron(W2, I_tH) block-diagonal cls weights, f32
    b2b_ref : (K*tH, 1)      b2 repeated tH times, f32
    o_ref   : (K, tH, W)     f32 logits tile
    """
    C, h, w = z_ref.shape
    tH = ah_ref.shape[0]
    W = aw_ref.shape[1]
    K = w2b_ref.shape[0] // tH

    z = z_ref[...].astype(jnp.float32)                       # (C, h, w)
    # Height upsample, batched over channels: same dot_general form as the
    # flash-attention 'bqk,bkd->bqd' P@V matmul -> no in-kernel transpose.
    ah = jnp.broadcast_to(ah_ref[...], (C, tH, h))           # tiny broadcast
    p = jnp.einsum('cth,chw->ctw', ah, z,
                   preferred_element_type=jnp.float32)       # (C, tH, w)
    p2 = p.reshape(C * tH, w)                                # free: merge leading dims
    # Width upsample (plain 2-D MXU matmul).
    y = jnp.dot(p2, aw_ref[...], preferred_element_type=jnp.float32)  # (C*tH, W)
    # ReLU only after the full upsample (matches the original op order).
    y = jnp.maximum(y, 0.0)
    # head.cls as one block-diagonal matmul: rows (k, t) <- contract (c, t);
    # avoids any (C,tH,W)->(C,tH*W) sublane->lane relayout.
    out = jnp.dot(w2b_ref[...], y, preferred_element_type=jnp.float32)
    out = out + b2b_ref[...]
    o_ref[...] = out.reshape(K, tH, W).astype(o_ref.dtype)   # free: split leading dim


# ----------------------------------------------------------------------------
# Tiling / compiler-parameter helpers
# ----------------------------------------------------------------------------
def _largest_divisor_tile(n, unit, target):
    """Largest multiple of `unit` dividing n with unit <= tile <= target, else None."""
    t = (min(target, n) // unit) * unit
    while t >= unit:
        if n % t == 0:
            return t
        t -= unit
    return None


def _plan_cols(cols, target):
    """Stage-1 column (lane) axis: tile must be a multiple of 128 or the whole
    axis.  Pads rather than silently using a whole huge axis (keeps blocks
    inside VMEM on every generation)."""
    target = max(target, 128)
    if cols <= target:
        return cols, cols
    t = _largest_divisor_tile(cols, 128, target)
    if t is not None:
        return cols, t
    cols_p = cols + (-cols) % 128
    return cols_p, _largest_divisor_tile(cols_p, 128, target)


def _plan_h(H, W, target_cols):
    """Output-H axis of the fused kernel: tH must be a multiple of 8 (sublane)
    or the whole axis.  tH*W bounds the f32 intermediates (~C*tH*W*4 bytes) so
    they always fit VMEM; pads H instead of falling back to a whole huge axis."""
    tgt = max(8, target_cols // max(W, 1))
    if H <= tgt:
        return H, H
    t = _largest_divisor_tile(H, 8, tgt)
    if t is not None:
        return H, t
    Hp = H + (-H) % 8
    return Hp, _largest_divisor_tile(Hp, 8, tgt)


def _vmem_limit_bytes():
    """v5e/v6e have 128 MiB physical VMEM -> allow 64 MiB; v7x has 64 -> keep 32."""
    try:
        kind = jax.devices()[0].device_kind.lower()
    except Exception:
        kind = ""
    return (64 if ("v5" in kind or "v6" in kind) else 32) * 1024 * 1024


def _cparams(sem, vmem_bytes):
    return pltpu.CompilerParams(dimension_semantics=sem,
                                vmem_limit_bytes=vmem_bytes)


# ----------------------------------------------------------------------------
# Head: conv_1+BN (folded, pre-upsample) -> fused [upsample -> ReLU -> cls]
# ----------------------------------------------------------------------------
def uhrnet_head_pallas(feat, A_h, A_w, w1f, b1f, w2, b2, *,
                       col_tile=8192, h_tile_cols=32768):
    """feat: (N, C, h, w) f32 backbone features -> (N, K, H, W) f32 logits.

    A_h: (H, h) / A_w: (W, w): separable align_corners=True bilinear factors
    (kept f32: tiny, VMEM-resident, row-sums stay exactly 1 for the bias fold).
    w1f/b1f: head.conv_1 with eval-BatchNorm folded in.  w2/b2: head.cls.
    """
    N, C, h, w = feat.shape
    H, W = A_h.shape[0], A_w.shape[0]
    K = w2.shape[0]
    bf16 = jnp.bfloat16
    vlim = _vmem_limit_bytes()

    # ---- stage 1: head.conv_1 + folded BN on the SMALL (1/16-res) map ------
    # Exact reordering: a 1x1 channel mix commutes with spatial interpolation
    # and the bias passes through because bilinear rows sum to 1.
    cols = h * w
    feat2 = feat.reshape(N, C, cols)                 # free metadata reshape
    cols_p, tc = _plan_cols(cols, col_tile)
    if cols_p != cols:
        feat2 = jnp.pad(feat2, ((0, 0), (0, 0), (0, cols_p - cols)))
    z2 = pl.pallas_call(
        _channel_mix_kernel,
        out_shape=jax.ShapeDtypeStruct((N, C, cols_p), bf16),
        grid_spec=pltpu.PrefetchScalarGridSpec(
            num_scalar_prefetch=0,
            grid=(N, cols_p // tc),
            in_specs=[pl.BlockSpec((None, C, tc), lambda n, j: (n, 0, j)),
                      pl.BlockSpec((C, C), lambda n, j: (0, 0)),
                      pl.BlockSpec((C, 1), lambda n, j: (0, 0))],
            out_specs=pl.BlockSpec((None, C, tc), lambda n, j: (n, 0, j))),
        compiler_params=_cparams(("parallel", "parallel"), vlim),
    )(feat2.astype(bf16), w1f.astype(bf16), b1f.astype(jnp.float32))
    if cols_p != cols:
        z2 = z2[:, :, :cols]
    z = z2.reshape(N, C, h, w)                       # free metadata reshape

    # ---- fused stages 2-4: h-interp -> w-interp -> ReLU -> cls -------------
    # Grid (N, H-tiles), both "parallel" (v7x megacore sharding; measured
    # no-op on single-TC v5e/v6e).  z's index map is constant in the tile
    # index, so the per-batch slab is DMA'd once per batch.
    # (head.drop_out = Dropout2d(p=0.0) is the identity.)
    Hp, tH = _plan_h(H, W, h_tile_cols)
    A_hp = A_h if Hp == H else jnp.concatenate(
        [A_h, jnp.tile(A_h[-1:], (Hp - H, 1))], axis=0)
    nH = Hp // tH
    w2big = jnp.kron(w2.astype(jnp.float32), jnp.eye(tH, dtype=jnp.float32))
    b2big = jnp.repeat(b2.astype(jnp.float32), tH).reshape(K * tH, 1)

    out = pl.pallas_call(
        _upsample_relu_cls_kernel,
        out_shape=jax.ShapeDtypeStruct((N, K, Hp, W), jnp.float32),
        grid_spec=pltpu.PrefetchScalarGridSpec(
            num_scalar_prefetch=0,
            grid=(N, nH),
            in_specs=[pl.BlockSpec((None, C, h, w), lambda n, j: (n, 0, 0, 0)),
                      pl.BlockSpec((tH, h), lambda n, j: (j, 0)),
                      pl.BlockSpec((w, W), lambda n, j: (0, 0)),
                      pl.BlockSpec((K * tH, C * tH), lambda n, j: (0, 0)),
                      pl.BlockSpec((K * tH, 1), lambda n, j: (0, 0))],
            out_specs=pl.BlockSpec((None, K, tH, W), lambda n, j: (n, 0, j, 0))),
        compiler_params=_cparams(("parallel", "parallel"), vlim),
    )(z, A_hp.astype(jnp.float32), A_w.T.astype(jnp.float32), w2big, b2big)

    if Hp != H:
        out = out[:, :, :H, :]
    return out


# ----------------------------------------------------------------------------
# Glue: separable align_corners=True bilinear factors, backbone stand-in
# ----------------------------------------------------------------------------
def interp_matrix(out_size, in_size):
    """Row-stochastic A with out = A @ in (torch bilinear, align_corners=True)."""
    A = np.zeros((out_size, in_size), dtype=np.float32)
    if in_size == 1 or out_size == 1:
        A[:, 0] = 1.0
        return A
    for o in range(out_size):
        s = o * (in_size - 1) / (out_size - 1)
        i0 = int(np.floor(s))
        i1 = min(i0 + 1, in_size - 1)
        f = s - i0
        A[o, i0] += 1.0 - f
        A[o, i1] += f
    return A


def backbone_standin(x, w_proj, b_proj):
    # TODO(synk): the real UHRNet_W48 backbone lives in net/backbone.py which is
    # not provided; stand in with a deterministic 4x-downsampling stem
    # (4x4 avg-pool + 1x1 channel projection + ReLU) emitting the
    # (N, 48, H/4, W/4) feature map the real backbone would produce.
    N, Cin, H, W = x.shape
    pooled = x.reshape(N, Cin, H // 4, 4, W // 4, 4).mean(axis=(3, 5))
    feat = jnp.einsum("oc,nchw->nohw", w_proj, pooled) + b_proj[None, :, None, None]
    return jax.nn.relu(feat)


# ----------------------------------------------------------------------------
# Full forward (UHRnet.forward semantics; self.softmax is never applied)
# ----------------------------------------------------------------------------
def uhrnet_forward(x, params, *, h_tile_cols=32768):
    N, Cin, H, W = x.shape
    feat = backbone_standin(x, params["stem_w"], params["stem_b"])   # (N,C,h,w)
    _, C, h, w = feat.shape

    # separable factors of F.interpolate(..., 'bilinear', align_corners=True)
    A_h = jnp.asarray(interp_matrix(H, h))        # (H, h)
    A_w = jnp.asarray(interp_matrix(W, w))        # (W, w)

    # fold eval-mode BatchNorm into head.conv_1:  w1' = s*W1,  b1' = s*b1 + t
    eps = 1e-5
    s = params["bn_gamma"] / jnp.sqrt(params["bn_var"] + eps)
    t = params["bn_beta"] - params["bn_mean"] * s
    w1f = s[:, None] * params["w1"]
    b1f = (s * params["b1"] + t)[:, None]

    return uhrnet_head_pallas(feat, A_h, A_w, w1f, b1f,
                              params["w2"], params["b2"],
                              h_tile_cols=h_tile_cols)


def reference_forward(feat, A_h, A_w, params):
    """Pure-JAX reference in the ORIGINAL op order: upsample -> conv_1 -> BN
    -> ReLU -> cls (all f32)."""
    eps = 1e-5
    up = jnp.einsum("Hh,nchw,Ww->ncHW", A_h, feat, A_w)
    y = (jnp.einsum("oc,ncHW->noHW", params["w1"], up)
         + params["b1"][None, :, None, None])
    s = params["bn_gamma"] / jnp.sqrt(params["bn_var"] + eps)
    t = params["bn_beta"] - params["bn_mean"] * s
    y = y * s[None, :, None, None] + t[None, :, None, None]
    y = jnp.maximum(y, 0.0)
    return (jnp.einsum("kc,ncHW->nkHW", params["w2"], y)
            + params["b2"][None, :, None, None])


def make_params(key, c_in=4, c_feat=48, num_classes=16):
    ks = jax.random.split(key, 8)
    return {
        # backbone stand-in (1x1 projection after pooling)
        "stem_w": jax.random.normal(ks[0], (c_feat, c_in), jnp.float32) * 0.2,
        "stem_b": jax.random.normal(ks[1], (c_feat,), jnp.float32) * 0.05,
        # head.conv_1 : ConvBnReLU (1x1 conv with bias -> BatchNorm2d -> ReLU)
        "w1": jax.random.normal(ks[2], (c_feat, c_feat), jnp.float32) * 0.1,
        "b1": jax.random.normal(ks[3], (c_feat,), jnp.float32) * 0.05,
        "bn_gamma": 1.0 + 0.1 * jax.random.normal(ks[4], (c_feat,), jnp.float32),
        "bn_beta": 0.05 * jax.random.normal(ks[5], (c_feat,), jnp.float32),
        "bn_mean": jnp.zeros((c_feat,), jnp.float32),
        "bn_var": jnp.ones((c_feat,), jnp.float32),
        # head.cls : 1x1 conv with bias
        "w2": jax.random.normal(ks[6], (num_classes, c_feat), jnp.float32) * 0.1,
        "b2": jax.random.normal(ks[7], (num_classes,), jnp.float32) * 0.05,
    }


if __name__ == "__main__":
    key = jax.random.PRNGKey(0)
    k_x, k_p = jax.random.split(key)
    # NCHW input like PyTorch: batch=2, channels=4, spatial=16x16
    x = jax.random.normal(k_x, (2, 4, 16, 16), jnp.float32)
    params = make_params(k_p, c_in=4, c_feat=48, num_classes=16)

    # h_tile_cols=128 keeps the toy run on the multi-H-tile path (tH=8, 2 tiles
    # per image); the 32768 default is for real resolutions.
    out = uhrnet_forward(x, params, h_tile_cols=128)   # (2, 16, 16, 16)
    out = jax.block_until_ready(out)
    assert out.shape == (2, 16, 16, 16)
    assert bool(jnp.all(jnp.isfinite(out)))

    # numerical check vs the original-order pure-JAX reference (only the
    # streamed activations / stage-1 weights are bf16, so tolerance is tight).
    feat = backbone_standin(x, params["stem_w"], params["stem_b"])
    A_h = jnp.asarray(interp_matrix(16, feat.shape[2]))
    A_w = jnp.asarray(interp_matrix(16, feat.shape[3]))
    ref = reference_forward(feat, A_h, A_w, params)
    err = float(jnp.max(jnp.abs(out - ref)))
    scale = float(jnp.max(jnp.abs(ref))) + 1e-6
    assert err <= 0.03 * scale + 0.01, (err, scale)

    print("KERNEL_OK")
</pallas_src>

<mosaic_0001>
module attributes {stable_mosaic.version = 11 : i64} {
  func.func @_channel_mix_kernel(%arg0: i32, %arg1: i32, %arg2: memref<1x48x16xbf16, #tpu.memory_space<vmem>>, %arg3: memref<48x48xbf16, #tpu.memory_space<vmem>>, %arg4: memref<48x1xf32, #tpu.memory_space<vmem>>, %arg5: memref<1x48x16xbf16, #tpu.memory_space<vmem>>) attributes {dimension_semantics = [#tpu.dimension_semantics<parallel>, #tpu.dimension_semantics<parallel>], iteration_bounds = array<i64: 2, 1>, scalar_prefetch = 0 : i64, scratch_operands = 0 : i64, tpu.core_type = #tpu.core_type<tc>, window_params = [{transform_indices = @transform_0, window_bounds = array<i64: 1, 48, 16>}, {pipeline_mode = #tpu.pipeline_mode<synchronous>, transform_indices = @transform_1, window_bounds = array<i64: 48, 48>}, {pipeline_mode = #tpu.pipeline_mode<synchronous>, transform_indices = @transform_2, window_bounds = array<i64: 48, 1>}, {transform_indices = @transform_3, window_bounds = array<i64: 1, 48, 16>}]} {
    %c0 = arith.constant 0 : index
    %c0_0 = arith.constant 0 : index
    %0 = vector.load %arg3[%c0, %c0_0] : memref<48x48xbf16, #tpu.memory_space<vmem>>, vector<48x48xbf16>
    %c0_1 = arith.constant 0 : index
    %c0_2 = arith.constant 0 : index
    %c0_3 = arith.constant 0 : index
    %1 = vector.load %arg2[%c0_1, %c0_2, %c0_3] : memref<1x48x16xbf16, #tpu.memory_space<vmem>>, vector<1x48x16xbf16>
    %2 = vector.shape_cast %1 : vector<1x48x16xbf16> to vector<48x16xbf16>
    %cst = arith.constant dense<0.000000e+00> : vector<48x16xf32>
    %3 = tpu.matmul %0, %2, %cst {dimension_numbers = #tpu.dot_dimension_numbers<[1], [0], [0], [1], [0, 0, 1, 1], [], []>} : vector<48x48xbf16>, vector<48x16xbf16>, vector<48x16xf32> -> vector<48x16xf32>
    %c0_4 = arith.constant 0 : index
    %c0_5 = arith.constant 0 : index
    %4 = vector.load %arg4[%c0_4, %c0_5] : memref<48x1xf32, #tpu.memory_space<vmem>>, vector<48x1xf32>
    %5 = vector.broadcast %4 : vector<48x1xf32> to vector<48x16xf32>
    %6 = arith.addf %3, %5 : vector<48x16xf32>
    %7 = arith.truncf %6 : vector<48x16xf32> to vector<48x16xbf16>
    %c0_6 = arith.constant 0 : index
    %c0_7 = arith.constant 0 : index
    %c0_8 = arith.constant 0 : index
    %8 = vector.load %arg5[%c0_6, %c0_7, %c0_8] : memref<1x48x16xbf16, #tpu.memory_space<vmem>>, vector<1x48x16xbf16>
    %9 = vector.shape_cast %8 : vector<1x48x16xbf16> to vector<48x16xbf16>
    %10 = vector.shape_cast %7 : vector<48x16xbf16> to vector<1x48x16xbf16>
    tpu.vector_store %arg5[%c0_6, %c0_7, %c0_8], %10 {strides = array<i32>} : memref<1x48x16xbf16, #tpu.memory_space<vmem>>, vector<1x48x16xbf16>,
    return
  }
  func.func @transform_0(%arg0: i32, %arg1: i32) -> (i32, i32, i32) {
    %c0_i32 = arith.constant 0 : i32
    %c0_i32_0 = arith.constant 0 : i32
    return %arg0, %c0_i32, %arg1 : i32, i32, i32
  }
  func.func @transform_1(%arg0: i32, %arg1: i32) -> (i32, i32) {
    %c0_i32 = arith.constant 0 : i32
    %c0_i32_0 = arith.constant 0 : i32
    %c0_i32_1 = arith.constant 0 : i32
    return %c0_i32, %c0_i32_0 : i32, i32
  }
  func.func @transform_2(%arg0: i32, %arg1: i32) -> (i32, i32) {
    %c0_i32 = arith.constant 0 : i32
    %c0_i32_0 = arith.constant 0 : i32
    %c0_i32_1 = arith.constant 0 : i32
    return %c0_i32, %c0_i32_0 : i32, i32
  }
  func.func @transform_3(%arg0: i32, %arg1: i32) -> (i32, i32, i32) {
    %c0_i32 = arith.constant 0 : i32
    %c0_i32_0 = arith.constant 0 : i32
    return %arg0, %c0_i32, %arg1 : i32, i32, i32
  }
}

</mosaic_0001>

<llo_original>
// kernel: tpu_custom_call.1
$region0: #{tpu_custom_call.1}
  #allocation0 [shape = 'u32[]', space=smem, size = 0x4, offset = 0x4, fixed_abs, tag = 'smem constant byte address 0x4 - core index']
  #allocation1 [shape = 'u32[144,128]{1,0:T(1,128)}', space=vmem, size = 0x12000, scoped, tag = 'internal scratch']
  %s0 = inlined_call_operand.vmem [shape: bf16[2,48,16], index: 0, kind: input, shape index: {}]
  %s1 = inlined_call_operand.vmem [shape: bf16[48,48], index: 1, kind: input, shape index: {}]
  %s2 = inlined_call_operand.vmem [shape: f32[48,1], index: 2, kind: input, shape index: {}]
  %s3 = inlined_call_operand.vmem [shape: bf16[2,48,16], index: 3, kind: output, shape index: {}]
  %s4 = sld [smem:[#allocation0]]
  $region45: #{tpu_custom_call.1} parent=0
    _
  %s6 = ssub.s32 1, %s4
  %s7 = scalar_select 0, %s6, %s4
  loop: start=0, step=1, limit=4
  $region2: #{tpu_custom_call.1} parent=0 // loop_pre_header
    _
  $region3: #{tpu_custom_call.1} parent=0 // loop_header
    %s9 = sphi 0, %s13
    %p10 = scmp.ge.s32.totalorder %s9, 4
    %s16 = sphi 0, %s28
    %s17 = sphi 0, %s24
    %s18 = sphi 0, %s16
    %s19 = sphi 0, %s17
    %s20 = sphi 0, %s18
    %s21 = sphi 0, %s19
    %s33 = sphi 0, %s35
    %s36 = sphi 0, %s33
    %s37 = sphi 0, %s36
    %s53 = sphi 0, %s37
    %s57 = sphi 0, %s57
    %s59 = sphi 0, %s57
    %s60 = sphi 0, %s59
    %s74 = sphi 0, %s60
    %s78 = sphi 0, %s78
    %s80 = sphi 0, %s78
    %s81 = sphi 0, %s80
    %s95 = sphi 0, %s81
    %s103 = sphi 0, %s105
    %s106 = sphi 0, %s103
    %s107 = sphi 0, %s106
    %s123 = sphi 0, %s107
  $region4: #{tpu_custom_call.1} parent=0 // loop_header_branch
    %12 = sbr.rel (%p10) target = $region8
  $region5: #{tpu_custom_call.1} parent=0 // loop_body
    %s14 = ssub.s32 %s9, 1
    %s15 = ssub.s32 %s9, 2
    %s22 = sadd.s32 1, %s17
    %p23 = scmp.ge.s32.totalorder %s22, 1
    %s24 = scalar_select %p23, 0, %s22
    %s25 = sadd.s32 1, %s16
    %s26 = scalar_select %p23, %s25, %s16
    %p27 = scmp.ge.s32.totalorder %s26, 2
    %s28 = scalar_select %p27, 0, %s26
    %s29 = ssub.s32 %s16, %s28
    %s30 = ssub.s32 %s17, %s24
    %s31 = sor.u32 %s29, %s30
    %p32 = scmp.eq.s32.totalorder %s31, 0
    %s34 = sadd.s32 %s33, 1
    %s35 = scalar_select %p32, %s33, %s34
    %p38 = pneg %p32
    %p39 = scmp.eq.s32.totalorder %s9, 1
    %p40 = por %p38, %p39
    %p41 = scmp.ne.s32.totalorder %s33, %s36
    %p42 = scmp.eq.s32.totalorder %s9, 0
    %p43 = por %p41, %p42
    %p44 = scmp.ne.s32.totalorder %s33, %s36
    %p45 = scmp.eq.s32.totalorder %s14, 1
    %p46 = por %p44, %p45
    %p47 = scmp.ne.s32.totalorder %s36, %s37
    %p48 = scmp.eq.s32.totalorder %s14, 0
    %p49 = por %p47, %p48
    %p50 = scmp.ne.s32.totalorder %s36, %s37
    %p51 = scmp.eq.s32.totalorder %s15, 1
    %p52 = por %p50, %p51
    %p54 = scmp.ne.s32.totalorder %s37, %s53
    %p55 = scmp.eq.s32.totalorder %s15, 0
    %p56 = por %p54, %p55
    %s58 = sadd.s32 %s57, 1
    %p61 = scmp.eq.s32.totalorder %s9, 1
    %p62 = scmp.ne.s32.totalorder %s57, %s59
    %p63 = scmp.eq.s32.totalorder %s9, 0
    %p64 = por %p62, %p63
    %p65 = scmp.ne.s32.totalorder %s57, %s59
    %p66 = scmp.eq.s32.totalorder %s14, 1
    %p67 = por %p65, %p66
    %p68 = scmp.ne.s32.totalorder %s59, %s60
    %p69 = scmp.eq.s32.totalorder %s14, 0
    %p70 = por %p68, %p69
    %p71 = scmp.ne.s32.totalorder %s59, %s60
    %p72 = scmp.eq.s32.totalorder %s15, 1
    %p73 = por %p71, %p72
    %p75 = scmp.ne.s32.totalorder %s60, %s74
    %p76 = scmp.eq.s32.totalorder %s15, 0
    %p77 = por %p75, %p76
    %s79 = sadd.s32 %s78, 1
    %p82 = scmp.eq.s32.totalorder %s9, 1
    %p83 = scmp.ne.s32.totalorder %s78, %s80
    %p84 = scmp.eq.s32.totalorder %s9, 0
    %p85 = por %p83, %p84
    %p86 = scmp.ne.s32.totalorder %s78, %s80
    %p87 = scmp.eq.s32.totalorder %s14, 1
    %p88 = por %p86, %p87
    %p89 = scmp.ne.s32.totalorder %s80, %s81
    %p90 = scmp.eq.s32.totalorder %s14, 0
    %p91 = por %p89, %p90
    %p92 = scmp.ne.s32.totalorder %s80, %s81
    %p93 = scmp.eq.s32.totalorder %s15, 1
    %p94 = por %p92, %p93
    %p96 = scmp.ne.s32.totalorder %s81, %s95
    %p97 = scmp.eq.s32.totalorder %s15, 0
    %p98 = por %p96, %p97
    %s99 = ssub.s32 %s16, %s28
    %s100 = ssub.s32 %s17, %s24
    %s101 = sor.u32 %s99, %s100
    %p102 = scmp.eq.s32.totalorder %s101, 0
    %s104 = sadd.s32 %s103, 1
    %s105 = scalar_select %p102, %s103, %s104
    %p108 = pneg %p102
    %p109 = scmp.eq.s32.totalorder %s9, 1
    %p110 = por %p108, %p109
    %p111 = scmp.ne.s32.totalorder %s103, %s106
    %p112 = scmp.eq.s32.totalorder %s9, 0
    %p113 = por %p111, %p112
    %p114 = scmp.ne.s32.totalorder %s103, %s106
    %p115 = scmp.eq.s32.totalorder %s14, 1
    %p116 = por %p114, %p115
    %p117 = scmp.ne.s32.totalorder %s106, %s107
    %p118 = scmp.eq.s32.totalorder %s14, 0
    %p119 = por %p117, %p118
    %p120 = scmp.ne.s32.totalorder %s106, %s107
    %p121 = scmp.eq.s32.totalorder %s15, 1
    %p122 = por %p120, %p121
    %p124 = scmp.ne.s32.totalorder %s107, %s123
    %p125 = scmp.eq.s32.totalorder %s15, 0
    %p126 = por %p124, %p125
    %p127 = scmp.le.s32.totalorder 1, %s9
    %p128 = scmp.lt.s32.totalorder %s9, 3
    %p129 = pnand %p127, %p128
    %p130 = pneg %p129
    // Predicated region
    $region9: #{tpu_custom_call.1} parent=5 // pred_check
      _
    $region10: #{tpu_custom_call.1} parent=5 // pred_check_branch
      %132 = sbr.rel (%p129) target = $region12
    $region11: #{tpu_custom_call.1} parent=5 // pred_region
      %s133 = ssub.s32 %s9, 1
      // Predicated region
      $region13: #{tpu_custom_call.1} parent=11 // pred_check
        %p134 = pneg %p70
      $region14: #{tpu_custom_call.1} parent=11 // pred_check_branch
        %136 = sbr.rel (%p134) target = $region16
      $region15: #{tpu_custom_call.1} parent=11 // pred_region
        _
      $region16: #{tpu_custom_call.1} parent=11 // pred_fallthru
        _
      // Predicated region
      $region17: #{tpu_custom_call.1} parent=11 // pred_check
        %p137 = pneg %p91
      $region18: #{tpu_custom_call.1} parent=11 // pred_check_branch
        %139 = sbr.rel (%p137) target = $region20
      $region19: #{tpu_custom_call.1} parent=11 // pred_region
        _
      $region20: #{tpu_custom_call.1} parent=11 // pred_fallthru
        _
    $region12: #{tpu_custom_call.1} parent=5 // pred_fallthru
      _
    %p140 = scmp.lt.s32.totalorder %s9, 2
    // Predicated region
    $region21: #{tpu_custom_call.1} parent=5 // pred_check
      %p141 = pneg %p140
    $region22: #{tpu_custom_call.1} parent=5 // pred_check_branch
      %143 = sbr.rel (%p141) target = $region24
    $region23: #{tpu_custom_call.1} parent=5 // pred_region
      // Predicated region
      $region25: #{tpu_custom_call.1} parent=23 // pred_check
        %p144 = pneg %p43
      $region26: #{tpu_custom_call.1} parent=23 // pred_check_branch
        %146 = sbr.rel (%p144) target = $region28
      $region27: #{tpu_custom_call.1} parent=23 // pred_region
        %p147 = scmp.lt.s32.totalorder %s16, 1
        %s148 = scalar_select %p147, %s16, 1
        %p149 = scmp.lt.s32.totalorder %s17, 0
        %s150 = scalar_select %p149, %s17, 0
        %s151 = smul.addr %s148, 6
        %s152 = sadd.s32 %s150, %s151
        %s153 = smul.addr %s152, 4
        %s154 = scalar_lea.vmem %s0, %s153
      $region28: #{tpu_custom_call.1} parent=23 // pred_fallthru
        _
    $region24: #{tpu_custom_call.1} parent=5 // pred_fallthru
      _
    %p155 = scmp.le.s32.totalorder 1, %s9
    %p156 = scmp.lt.s32.totalorder %s9, 3
    %p157 = pnand %p155, %p156
    %p158 = pneg %p157
    // Predicated region
    $region29: #{tpu_custom_call.1} parent=5 // pred_check
      _
    $region30: #{tpu_custom_call.1} parent=5 // pred_check_branch
      %160 = sbr.rel (%p157) target = $region32
    $region31: #{tpu_custom_call.1} parent=5 // pred_region
      %s161 = ssub.s32 %s9, 1
      %p162 = scmp.lt.s32.totalorder %s18, 1
      %s163 = scalar_select %p162, %s18, 1
      %p164 = scmp.lt.s32.totalorder %s19, 0
      %s165 = scalar_select %p164, %s19, 0
      %s166 = smul.addr %s163, 6
      %s167 = sadd.s32 %s165, %s166
      %s168 = smul.addr %s167, 4
      %s169 = scalar_lea.vmem %s0, %s168
      %p170 = pneg %p49
      %p171 = pneg %p46
      %p172 = pneg %p70
      %p173 = pneg %p67
      %p174 = pneg %p91
      %p175 = pneg %p88
      %p176 = pneg %p119
      %p177 = pneg %p116
      %p178 = scmp.lt.s32.totalorder %s18, 1
      %s179 = scalar_select %p178, %s18, 1
      %p180 = scmp.lt.s32.totalorder %s19, 0
      %s181 = scalar_select %p180, %s19, 0
      %s182 = smul.addr %s179, 6
      %s183 = sadd.s32 %s181, %s182
      %s184 = smul.addr %s183, 4
      %s185 = scalar_lea.vmem %s3, %s184
      %p186 = scmp.lt.s32.totalorder %s18, 1
      %s187 = scalar_select %p186, %s18, 1
      %p188 = scmp.lt.s32.totalorder %s19, 0
      %s189 = scalar_select %p188, %s19, 0
      %s190 = smul.addr %s187, 6
      %s191 = sadd.s32 %s189, %s190
      %s192 = smul.addr %s191, 4
      %s193 = scalar_lea.vmem %s0, %s192
      %p194 = scmp.lt.s32.totalorder %s18, 1
      %s195 = scalar_select %p194, %s18, 1
      %p196 = scmp.lt.s32.totalorder %s19, 0
      %s197 = scalar_select %p196, %s19, 0
      %s198 = smul.addr %s195, 6
      %s199 = sadd.s32 %s197, %s198
      %s200 = smul.addr %s199, 4
      %s201 = scalar_lea.vmem %s3, %s200
      %v203 = vld [vmem:[%s1] sm:$0xf]
      %v204 = vld [vmem:[%s1 + $0x4] sm:$0xf]
      %v205 = vld [vmem:[%s1 + $0x8] sm:$0xf]
      %v206 = vld [vmem:[%s1 + $0xc] sm:$0xf]
      %v207 = vld [vmem:[%s1 + $0x10] sm:$0xf]
      %v208 = vld [vmem:[%s1 + $0x14] sm:$0xf]
      %v209 = vld [vmem:[%s193] sm:$0xf]
      %v210 = vld [vmem:[%s193 + $0x4] sm:$0xf]
      %v211 = vld [vmem:[%s193 + $0x8] sm:$0xf]
      %v212 = vld [vmem:[%s193 + $0xc] sm:$0xf]
      %v213 = vld [vmem:[%s193 + $0x10] sm:$0xf]
      %v214 = vld [vmem:[%s193 + $0x14] sm:$0xf]
      %v215 = vld [vmem:[%s2] sm:$0xff]
      %v216 = vld [vmem:[%s2 + $0x8] sm:$0xff]
      %v217 = vld [vmem:[%s2 + $0x10] sm:$0xff]
      %v218 = vld [vmem:[%s2 + $0x18] sm:$0xff]
      %v219 = vld [vmem:[%s2 + $0x20] sm:$0xff]
      %v220 = vld [vmem:[%s2 + $0x28] sm:$0xff]
      %222 = vset.pattern.permute.xlu0 0
      %223 = vperm.xlu0 %222, %v215
      %v224 = vpop.permute.xlu0 %223
      %227 = vset.pattern.permute.xlu0 0
      %228 = vperm.xlu0 %227, %v216
      %v229 = vpop.permute.xlu0 %228
      %232 = vset.pattern.permute.xlu0 0
      %233 = vperm.xlu0 %232, %v217
      %v234 = vpop.permute.xlu0 %233
      %237 = vset.pattern.permute.xlu0 0
      %238 = vperm.xlu0 %237, %v218
      %v239 = vpop.permute.xlu0 %238
      %242 = vset.pattern.permute.xlu0 0
      %243 = vperm.xlu0 %242, %v219
      %v244 = vpop.permute.xlu0 %243
      %247 = vset.pattern.permute.xlu0 0
      %248 = vperm.xlu0 %247, %v220
      %v249 = vpop.permute.xlu0 %248
      %v257 = vunpack.c.l.b16 %v203
      %v258 = vunpack.c.l.b16 %v204
      %v259 = vunpack.c.l.b16 %v205
      %v260 = vunpack.c.l.b16 %v206
      %v261 = vunpack.c.l.b16 %v207
      %v262 = vunpack.c.l.b16 %v208
      %v263 = vpack.c.b16 %v258, %v257
      %v264 = vpack.c.b16 %v260, %v259
      %v265 = vpack.c.b16 %v262, %v261
      %v272 = vunpack.c.l.b16 %v209
      %v273 = vunpack.c.l.b16 %v210
      %v274 = vunpack.c.l.b16 %v211
      %v275 = vunpack.c.l.b16 %v212
      %v276 = vunpack.c.l.b16 %v213
      %v277 = vunpack.c.l.b16 %v214
      %v278 = vpack.c.b16 %v273, %v272
      %v279 = vpack.c.b16 %v275, %v274
      %v280 = vpack.c.b16 %v277, %v276
      %vm284 = vcmask 392192
      %v286 = vsel %vm284, %v263, 0
      %v289 = vsel %vm284, %v264, 0
      %v292 = vsel %vm284, %v265, 0
      %294 = vmatprep.subr.bf16.mxu0 0
      %295 = vmatpush1.bf16.msra.mxu0 0
      %296 = vmatprep.subr.bf16.mxu0 0
      %297 = vmatpush1.bf16.msra.mxu0 0
      %298 = vmatprep.subr.bf16.mxu0 0
      %299 = vmatpush1.bf16.msra.mxu0 0
      %300 = vmatprep.subr.bf16.mxu0 0
      %301 = vmatpush1.bf16.msra.mxu0 0
      %302 = vmatprep.subr.bf16.mxu0 0
      %303 = vmatpush1.bf16.msra.mxu0 0
      %304 = vmatprep.subr.bf16.mxu0 0
      %305 = vmatpush1.bf16.msra.mxu0 %v280
      %306 = vmatprep.subr.bf16.mxu0 0
      %307 = vmatpush1.bf16.msra.mxu0 %v279
      %308 = vmatprep.subr.bf16.mxu0 0
      %309 = vmatpush1.bf16.msra.mxu0 %v278
      %310 = vmatprep.subr.bf16.mxu0 0
      %311 = vmatpush2.bf16.msra.mxu0 0
      %312 = vmatprep.subr.bf16.mxu0 0
      %313 = vmatpush2.bf16.msra.mxu0 0
      %314 = vmatprep.subr.bf16.mxu0 0
      %315 = vmatpush2.bf16.msra.mxu0 0
      %316 = vmatprep.subr.bf16.mxu0 0
      %317 = vmatpush2.bf16.msra.mxu0 0
      %318 = vmatprep.subr.bf16.mxu0 0
      %319 = vmatpush2.bf16.msra.mxu0 0
      %320 = vmatprep.subr.bf16.mxu0 0
      %321 = vmatpush2.bf16.msra.mxu0 0
      %322 = vmatprep.subr.bf16.mxu0 0
      %323 = vmatpush2.bf16.msra.mxu0 0
      %324 = vmatprep.subr.bf16.mxu0 0
      %325 = vmatpush2.bf16.msra.mxu0 0
      %326 = vmatprep.mubr.bf16.mxu0 0
      %327 = vmatmul.mubr.bf16.gmra.mxu0 %v286
      %v328 = vpop.f32.mrf.mxu0
      %v329 = vadd.f32 %v224, %v328
      %v330 = vpop.f32.mrf.mxu0
      %v331 = vpop.f32.mrf.mxu0
      %v332 = vadd.f32 %v229, %v331
      %v333 = vpop.f32.mrf.mxu0
      %334 = vmatprep.mubr.bf16.mxu0 0
      %335 = vmatmul.mubr.bf16.gmra.mxu0 %v289
      %v336 = vpop.f32.mrf.mxu0
      %v337 = vadd.f32 %v234, %v336
      %v338 = vpop.f32.mrf.mxu0
      %v339 = vpop.f32.mrf.mxu0
      %v340 = vadd.f32 %v239, %v339
      %v341 = vpop.f32.mrf.mxu0
      %342 = vmatprep.mubr.bf16.mxu0 0
      %343 = vmatmul.mubr.bf16.gmra.mxu0 %v292
      %v344 = vpop.f32.mrf.mxu0
      %v345 = vadd.f32 %v244, %v344
      %v346 = vpop.f32.mrf.mxu0
      %v347 = vpop.f32.mrf.mxu0
      %v348 = vadd.f32 %v249, %v347
      %v349 = vpop.f32.mrf.mxu0
      %350 = vdwg.mxu0
      %v351 = vpack.c.bf16 %v332, %v329
      %v352 = vpack.c.bf16 %v340, %v337
      %v353 = vpack.c.bf16 %v348, %v345
      %v357 = vunpack.c.l.b16 %v351
      %v358 = vunpack.c.h.b16 %v351
      %v359 = vunpack.c.l.b16 %v352
      %v360 = vunpack.c.h.b16 %v352
      %v361 = vunpack.c.l.b16 %v353
      %v362 = vunpack.c.h.b16 %v353
      %v363 = vpack.c.b16 %v357, %v357
      %v364 = vpack.c.b16 %v358, %v358
      %v365 = vpack.c.b16 %v359, %v359
      %v366 = vpack.c.b16 %v360, %v360
      %v367 = vpack.c.b16 %v361, %v361
      %v368 = vpack.c.b16 %v362, %v362
      %vm375 = vcmask 125952
      %376 = vst.msk [vmem:[%s201] sm:$0xf] %vm375, %v363
      %377 = vst.msk [vmem:[%s201 + $0x4] sm:$0xf] %vm375, %v364
      %378 = vst.msk [vmem:[%s201 + $0x8] sm:$0xf] %vm375, %v365
      %379 = vst.msk [vmem:[%s201 + $0xc] sm:$0xf] %vm375, %v366
      %380 = vst.msk [vmem:[%s201 + $0x10] sm:$0xf] %vm375, %v367
      %381 = vst.msk [vmem:[%s201 + $0x14] sm:$0xf] %vm375, %v368
      %p382 = scmp.lt.s32.totalorder %s18, 1
      %s383 = scalar_select %p382, %s18, 1
      %p384 = scmp.lt.s32.totalorder %s19, 0
      %s385 = scalar_select %p384, %s19, 0
      %s386 = smul.addr %s383, 6
      %s387 = sadd.s32 %s385, %s386
      %s388 = smul.addr %s387, 4
      %s389 = scalar_lea.vmem %s3, %s388
      // Predicated region
      $region33: #{tpu_custom_call.1} parent=31 // pred_check
        %p390 = pneg %p116
      $region34: #{tpu_custom_call.1} parent=31 // pred_check_branch
        %392 = sbr.rel (%p390) target = $region36
      $region35: #{tpu_custom_call.1} parent=31 // pred_region
        _
      $region36: #{tpu_custom_call.1} parent=31 // pred_fallthru
        _
    $region32: #{tpu_custom_call.1} parent=5 // pred_fallthru
      _
    %p393 = scmp.le.s32.totalorder 2, %s9
    // Predicated region
    $region37: #{tpu_custom_call.1} parent=5 // pred_check
      %p394 = pneg %p393
    $region38: #{tpu_custom_call.1} parent=5 // pred_check_branch
      %396 = sbr.rel (%p394) target = $region40
    $region39: #{tpu_custom_call.1} parent=5 // pred_region
      %s397 = ssub.s32 %s9, 2
      // Predicated region
      $region41: #{tpu_custom_call.1} parent=39 // pred_check
        %p398 = pneg %p122
      $region42: #{tpu_custom_call.1} parent=39 // pred_check_branch
        %400 = sbr.rel (%p398) target = $region44
      $region43: #{tpu_custom_call.1} parent=39 // pred_region
        %p401 = scmp.lt.s32.totalorder %s20, 1
        %s402 = scalar_select %p401, %s20, 1
        %p403 = scmp.lt.s32.totalorder %s21, 0
        %s404 = scalar_select %p403, %s21, 0
        %s405 = smul.addr %s402, 6
        %s406 = sadd.s32 %s404, %s405
        %s407 = smul.addr %s406, 4
        %s408 = scalar_lea.vmem %s3, %s407
      $region44: #{tpu_custom_call.1} parent=39 // pred_fallthru
        _
    $region40: #{tpu_custom_call.1} parent=5 // pred_fallthru
      _
  $region6: #{tpu_custom_call.1} parent=0 // loop_footer
    %s13 = sadd.s32 1, %s9
  $region7: #{tpu_custom_call.1} parent=0 // loop_footer_branch
    %8 = sbr.rel target = $region3
  $region8: #{tpu_custom_call.1} parent=0 // loop_exit
    _

</llo_original>
